<compile_context>
chip_gen: v7x
topology: tpu7x:2x2x1
jax: 0.10.0
libtpu: 0.0.40
codegen_flags: <defaults>
</compile_context>

<pallas_src>
import jax
import jax.numpy as jnp
from jax.experimental import pallas as pl
from jax.experimental.pallas import tpu as pltpu


def _weak_classifier_kernel(x_ref, w_ref, b_ref, o_ref):
    # x_ref: (TM, D) VMEM tile (pipelined per grid step)
    # w_ref: (1, D)  VMEM, resident across grid steps
    # b_ref: (1,)    SMEM scalar
    # o_ref: (1, TM) VMEM lane-dense output row for this batch tile
    x = x_ref[...].astype(jnp.float32)
    w = w_ref[...].astype(jnp.float32)          # (1, D) broadcasts over rows
    row = jnp.sum(x * w, axis=-1)               # VPU mul + XLU lane reduce -> (TM,)
    o_ref[...] = (row + b_ref[0])[None, :].astype(o_ref.dtype)


def _vmem_budget_bytes():
    """Generation-aware total VMEM budget for this kernel."""
    try:
        cap = pltpu.get_tpu_info().vmem_capacity_bytes
    except Exception:                       # no hw info (e.g. interpret mode)
        cap = 64 * 1024 * 1024
    if cap <= 64 * 1024 * 1024:             # v7x: 64 MiB physical per TensorCore
        return 28 * 1024 * 1024
    return 64 * 1024 * 1024                 # v5e / v6e: 128 MiB physical


def _pick_tm(batch, input_dim, itemsize, vmem_budget):
    """Rows per batch tile, sized by bytes (no fixed row cap)."""
    row_bytes = input_dim * itemsize
    # Largest multiple-of-128 row count such that two x buffers, the resident
    # (double-buffered) weight row, output rows and internal scratch all fit.
    headroom = 4 * 1024 * 1024 + 2 * input_dim * itemsize
    tm = max(128, ((vmem_budget - headroom) // (2 * row_bytes)) // 128 * 128)

    # v7x megacore: prefer >= 4 batch tiles (when B allows) so the "parallel"
    # axis can shard across both TensorCores, but never shrink a tile below
    # ~2 MiB.  Costs nothing on single-TC v5e/v6e.
    min_rows = max(128, ((2 * 1024 * 1024) // row_bytes) // 128 * 128)
    quarter = pl.cdiv(batch, 4 * 128) * 128
    tm = min(tm, max(min_rows, quarter))

    # Never taller than the (8-row rounded) batch: tiny batches get one exact
    # (or near-exact) block instead of a mostly-padded 128-row one.
    tm = min(tm, max(8, pl.cdiv(batch, 8) * 8))
    return tm


@jax.jit
def weak_classifier_forward(x, weight, bias):
    """PyTorch nn.Linear(input_dim, 1) forward: y = x @ weight.T + bias.

    x:      [B, D] float32 or bfloat16
    weight: [1, D] (PyTorch layout, used as-is — no transpose)
    bias:   [1]
    """
    B, D = x.shape
    itemsize = jnp.dtype(x.dtype).itemsize
    budget = _vmem_budget_bytes()
    tm = _pick_tm(B, D, itemsize, budget)
    n_tiles = pl.cdiv(B, tm)

    # Deepen input pipelining when tiles are small but numerous.
    x_spec_kwargs = {}
    if tm * D * itemsize < (1 << 20) and n_tiles >= 3:
        x_spec_kwargs["pipeline_mode"] = pl.Buffered(3)

    out_row = pl.pallas_call(
        _weak_classifier_kernel,
        out_shape=jax.ShapeDtypeStruct((1, n_tiles * tm), x.dtype),
        grid=(n_tiles,),
        in_specs=[
            # x: one (TM, D) batch tile per step -> pipelined HBM->VMEM DMA.
            # The last block may overhang B; Pallas pads the load.
            pl.BlockSpec((tm, D), lambda i: (i, 0), **x_spec_kwargs),
            # weight: full [1, D], constant index -> stays resident in VMEM.
            pl.BlockSpec((1, D), lambda i: (0, 0)),
            # bias: scalar in SMEM (no padded VMEM tile, no vector-load slot).
            pl.BlockSpec(memory_space=pltpu.MemorySpace.SMEM),
        ],
        # Lane-dense output rows; block always in-bounds of the padded row.
        out_specs=pl.BlockSpec((1, tm), lambda i: (0, i)),
        compiler_params=pltpu.CompilerParams(
            dimension_semantics=("parallel",),   # batch tiles across TCs on v7x
            vmem_limit_bytes=int(budget),        # raise v5e's 16 MiB default
        ),
        cost_estimate=pl.CostEstimate(
            flops=2 * B * D,
            transcendentals=0,
            bytes_accessed=(B * D + D) * itemsize + 4 + n_tiles * tm * itemsize,
        ),
    )(x, weight, bias)

    return out_row[0, :B].reshape(B, 1)


if __name__ == "__main__":
    key = jax.random.PRNGKey(0)
    kx, kw, kb, kx2 = jax.random.split(key, 4)

    batch, input_dim = 8, 32

    # Deterministic synthetic parameters (shapes match nn.Linear(input_dim, 1)).
    x = jax.random.normal(kx, (batch, input_dim), dtype=jnp.float32)
    bound = 1.0 / (input_dim ** 0.5)
    weight = jax.random.uniform(
        kw, (1, input_dim), minval=-bound, maxval=bound, dtype=jnp.float32
    )
    bias = jax.random.uniform(
        kb, (1,), minval=-bound, maxval=bound, dtype=jnp.float32
    )

    out = weak_classifier_forward(x, weight, bias)
    out = jax.block_until_ready(out)
    ref = x @ weight.T + bias
    assert out.shape == (batch, 1)
    assert jnp.allclose(out, ref, atol=1e-5, rtol=1e-5)

    # Second small check: batch not a multiple of 8 exercises the ragged
    # (un-padded) last block introduced by removing the wrapper-side pad.
    batch2 = 20
    x2 = jax.random.normal(kx2, (batch2, input_dim), dtype=jnp.float32)
    out2 = jax.block_until_ready(weak_classifier_forward(x2, weight, bias))
    ref2 = x2 @ weight.T + bias
    assert out2.shape == (batch2, 1)
    assert jnp.allclose(out2, ref2, atol=1e-5, rtol=1e-5)

    print("KERNEL_OK")
</pallas_src>

<mosaic_0001>
module attributes {stable_mosaic.version = 11 : i64} {
  func.func @_weak_classifier_kernel(%arg0: i32, %arg1: memref<8x32xf32, #tpu.memory_space<vmem>>, %arg2: memref<1x32xf32, #tpu.memory_space<vmem>>, %arg3: memref<1xf32, #tpu.memory_space<smem>>, %arg4: memref<1x8xf32, #tpu.memory_space<vmem>>) attributes {dimension_semantics = [#tpu.dimension_semantics<parallel>], iteration_bounds = array<i64: 1>, scalar_prefetch = 0 : i64, scratch_operands = 0 : i64, tpu.core_type = #tpu.core_type<tc>, window_params = [{transform_indices = @transform_0, window_bounds = array<i64: 8, 32>}, {pipeline_mode = #tpu.pipeline_mode<synchronous>, transform_indices = @transform_1, window_bounds = array<i64: 1, 32>}, {transform_indices = @transform_2, window_bounds = array<i64: 1>}, {transform_indices = @transform_3, window_bounds = array<i64: 1, 8>}]} {
    %c0 = arith.constant 0 : index
    %c0_0 = arith.constant 0 : index
    %0 = vector.load %arg1[%c0, %c0_0] : memref<8x32xf32, #tpu.memory_space<vmem>>, vector<8x32xf32>
    %c0_1 = arith.constant 0 : index
    %c0_2 = arith.constant 0 : index
    %1 = vector.load %arg2[%c0_1, %c0_2] : memref<1x32xf32, #tpu.memory_space<vmem>>, vector<1x32xf32>
    %2 = vector.broadcast %1 : vector<1x32xf32> to vector<8x32xf32>
    %3 = arith.mulf %0, %2 : vector<8x32xf32>
    %cst = arith.constant dense<0.000000e+00> : vector<8xf32>
    %4 = vector.multi_reduction <add>, %3, %cst [1] : vector<8x32xf32> to vector<8xf32>
    %c0_3 = arith.constant 0 : index
    %5 = memref.load %arg3[%c0_3] : memref<1xf32, #tpu.memory_space<smem>>
    %6 = vector.broadcast %5 : f32 to vector<8xf32>
    %7 = arith.addf %4, %6 : vector<8xf32>
    %8 = vector.shape_cast %7 : vector<8xf32> to vector<1x8xf32>
    %c0_4 = arith.constant 0 : index
    %c0_5 = arith.constant 0 : index
    %9 = vector.load %arg4[%c0_4, %c0_5] : memref<1x8xf32, #tpu.memory_space<vmem>>, vector<1x8xf32>
    tpu.vector_store %arg4[%c0_4, %c0_5], %8 {strides = array<i32>} : memref<1x8xf32, #tpu.memory_space<vmem>>, vector<1x8xf32>,
    return
  }
  func.func @transform_0(%arg0: i32) -> (i32, i32) {
    %c0_i32 = arith.constant 0 : i32
    %c0_i32_0 = arith.constant 0 : i32
    return %arg0, %c0_i32 : i32, i32
  }
  func.func @transform_1(%arg0: i32) -> (i32, i32) {
    %c0_i32 = arith.constant 0 : i32
    %c0_i32_0 = arith.constant 0 : i32
    %c0_i32_1 = arith.constant 0 : i32
    return %c0_i32, %c0_i32_0 : i32, i32
  }
  func.func @transform_2(%arg0: i32) -> i32 {
    %c0_i32 = arith.constant 0 : i32
    %c0_i32_0 = arith.constant 0 : i32
    return %c0_i32 : i32
  }
  func.func @transform_3(%arg0: i32) -> (i32, i32) {
    %c0_i32 = arith.constant 0 : i32
    %c0_i32_0 = arith.constant 0 : i32
    return %c0_i32, %arg0 : i32, i32
  }
}

</mosaic_0001>

<llo_original>
// kernel: weak_classifier_forward.1
$region0: #{weak_classifier_forward.1}
  #allocation0 [shape = 'u32[]', space=smem, size = 0x4, offset = 0x4, fixed_abs, tag = 'smem constant byte address 0x4 - core index']
  #allocation1 [shape = 'u32[144,128]{1,0:T(1,128)}', space=vmem, size = 0x12000, scoped, tag = 'internal scratch']
  #allocation2 [shape = 'f32[1]{0:T(128)S(6)}', space=smem, size = 0x200, scoped, tag = 'scoped memory for weak_classifier_forward.1']
  %s0 = inlined_call_operand.hbm [shape: f32[8,32], index: 0, kind: input, shape index: {}]
  %s1 = inlined_call_operand.vmem [shape: f32[1,32], index: 1, kind: input, shape index: {}]
  %s2 = inlined_call_operand.<no memory space> [shape: f32[1], index: 2, kind: input, shape index: {}]
  %s3 = inlined_call_operand.hbm [shape: f32[1,8], index: 3, kind: output, shape index: {}]
  %s4 = sld [smem:[#allocation0]]
  $region26: #{weak_classifier_forward.1} parent=0
    _
  %s6 = ssub.s32 1, %s4
  %s7 = scalar_select 0, %s6, %s4
  %8 = sst [smem:[#allocation2]] %s2
  $region1: #{weak_classifier_forward.1} parent=0
    #allocation3 [shape = 'u8[4096]{0}', space=vmem, size = 0x1000, scoped, tag = 'input window, operand 0, single buffered']
    #allocation4 [shape = 's32[1]{0}', space=sflag, size = 0x4, scoped, tag = 'scoped memory for weak_classifier_forward.1']
    #allocation5 [shape = 's32[1]{0}', space=sflag, size = 0x4, scoped, tag = 'scoped memory for weak_classifier_forward.1']
    #allocation6 [shape = 'u8[512]{0}', space=vmem, size = 0x400, scoped, tag = 'output window, operand 0, single buffered']
    %9 = vsyncpa [#allocation4], 0
    %10 = vsyncpa [#allocation5], 0
    // Predicated region
    $region2: #{weak_classifier_forward.1} parent=1 // pred_check
      _
    $region3: #{weak_classifier_forward.1} parent=1 // pred_check_branch
      %12 = sbr.rel (0) target = $region5
    $region4: #{weak_classifier_forward.1} parent=1 // pred_region
      %s14 = ssub.s32 128, 128
      %15 = vsyncadd [#allocation4], %s14
      %s17 = sshll.u32 [#allocation3], 4
      %s18 = int_to_ptr.vmem [resolvable:$true] %s17
      %20 = dma.hbm_to_vmem [thread:$0]  %s0, 128, %s18, [#allocation4]
    $region5: #{weak_classifier_forward.1} parent=1 // pred_fallthru
      _
    // Predicated region
    $region6: #{weak_classifier_forward.1} parent=1 // pred_check
      _
    $region7: #{weak_classifier_forward.1} parent=1 // pred_check_branch
      %22 = sbr.rel (0) target = $region9
    $region8: #{weak_classifier_forward.1} parent=1 // pred_region
      _
    $region9: #{weak_classifier_forward.1} parent=1 // pred_fallthru
      _
    // Predicated region
    $region10: #{weak_classifier_forward.1} parent=1 // pred_check
      _
    $region11: #{weak_classifier_forward.1} parent=1 // pred_check_branch
      %24 = sbr.rel (0) target = $region13
    $region12: #{weak_classifier_forward.1} parent=1 // pred_region
      _
    $region13: #{weak_classifier_forward.1} parent=1 // pred_fallthru
      _
    // Predicated region
    $region14: #{weak_classifier_forward.1} parent=1 // pred_check
      _
    $region15: #{weak_classifier_forward.1} parent=1 // pred_check_branch
      %26 = sbr.rel (0) target = $region17
    $region16: #{weak_classifier_forward.1} parent=1 // pred_region
      %27 = dma.done [#allocation4], 128
    $region17: #{weak_classifier_forward.1} parent=1 // pred_fallthru
      _
    %v28 = vld [vmem:[#allocation3] sm:$0xff]
    %v29 = vld [vmem:[%s1] sm:$0x1]
    %v31 = vlaneseq
    %v32 = vshrl.u32 %v31, 7
    %v33 = vsub.s32 0, %v32
    %v34 = vrot.slane %v29, %v33
    %v36 = vmul.f32 %v28, %v34
    %vm37 = vcmask 261120
    %v38 = vsel %vm37, %v36, 0.0
    %39 = vadd.xlane.f32.xlu0 %v38
    %v40 = vpop.xlane.xlu0 %39
    %s41 = sld [smem:[#allocation2]]
    %v42 = vstv %s41
    %v43 = vadd.f32 %v40, %v42
    %v45 = vlaneseq
    %v46 = vand.u32 %v45, 127
    %v47 = vlaneseq
    %v48 = vshrl.u32 %v47, 7
    %v49 = vsub.s32 %v46, %v48
    %v50 = vrot.slane %v43, %v49
    %vm52 = vcmask 57344
    %53 = vst.msk [vmem:[#allocation6] sm:$0x1] %vm52, %v50
    // Predicated region
    $region18: #{weak_classifier_forward.1} parent=1 // pred_check
      _
    $region19: #{weak_classifier_forward.1} parent=1 // pred_check_branch
      %55 = sbr.rel (0) target = $region21
    $region20: #{weak_classifier_forward.1} parent=1 // pred_region
      %s57 = ssub.s32 16, 16
      %58 = vsyncadd [#allocation5], %s57
      %s60 = sshll.u32 [#allocation6], 4
      %s61 = int_to_ptr.vmem [resolvable:$true] %s60
      %63 = dma.vmem_to_hbm [thread:$0]  %s61, 16, %s3, [#allocation5]
    $region21: #{weak_classifier_forward.1} parent=1 // pred_fallthru
      _
    // Predicated region
    $region22: #{weak_classifier_forward.1} parent=1 // pred_check
      _
    $region23: #{weak_classifier_forward.1} parent=1 // pred_check_branch
      %65 = sbr.rel (0) target = $region25
    $region24: #{weak_classifier_forward.1} parent=1 // pred_region
      %66 = dma.done [#allocation5], 16
    $region25: #{weak_classifier_forward.1} parent=1 // pred_fallthru
      _
    %67 = vsyncpa [#allocation4], 1
    %68 = vsyncpa [#allocation5], 1

</llo_original>
